<compile_context>
chip_gen: v5e
topology: v5e:2x2
jax: 0.10.0
libtpu: 0.0.40
codegen_flags: <defaults>
</compile_context>

<pallas_src>
import jax
import jax.numpy as jnp
from jax.experimental import pallas as pl
from jax.experimental.pallas import tpu as pltpu


def _round_up(x: int, m: int) -> int:
    return ((x + m - 1) // m) * m


def _fused_affine_kernel(x_ref, w_ref, b_ref, o_ref):
    """out = x @ Wc + bc  for one batch tile (Wc = collapsed weight chain)."""
    x = x_ref[...]
    if x.dtype != w_ref.dtype:
        x = x.astype(w_ref.dtype)                       # bf16 for the MXU
    y = jnp.dot(x, w_ref[...], preferred_element_type=jnp.float32)
    o_ref[...] = (y + b_ref[...]).astype(o_ref.dtype)   # bias add in f32 (VPU)


def prepare_params(weights, biases, param_dtype=jnp.bfloat16):
    """One-time parameter packing; call ONCE at init, never per forward.

    weights: list of [in_i, out_i] f32 arrays (transpose of PyTorch's [out, in])
    biases:  list of [out_i] f32 arrays
    Collapses the bias-free affine chain in f32, then casts the single
    collapsed weight to `param_dtype`; the collapsed bias stays f32.
    Returns (w_collapsed [num_inputs, 2], b_collapsed [1, 2]).
    """
    w_c = jnp.asarray(weights[0], jnp.float32)
    b_c = jnp.asarray(biases[0], jnp.float32)
    for w, b in zip(weights[1:], biases[1:]):
        w32 = jnp.asarray(w, jnp.float32)
        w_c = w_c @ w32
        b_c = b_c @ w32 + jnp.asarray(b, jnp.float32)
    return w_c.astype(param_dtype), b_c.reshape(1, -1)


def linear_net_continuous_forward(state, packed_params, *, batch_tile=2048):
    """state: [batch, num_inputs] (f32 or bf16)  ->  [batch, 2] f32."""
    w_c, b_c = packed_params
    batch, in_dim = state.shape
    assert in_dim == w_c.shape[0], (state.shape, w_c.shape)
    out_dim = int(w_c.shape[1])

    # Batch tile: multiple of 8 sublanes, capped at batch_tile rows.  For
    # batches above the cap this yields many steps; for mid-size batches it
    # yields an even 2-step grid so both TensorCores on v7x get work.  Tiny
    # batches (e.g. rollout of 1-8 rows) collapse to a single step.
    tile_b = max(8, min(_round_up(pl.cdiv(batch, 2), 8), batch_tile))
    grid = (pl.cdiv(batch, tile_b),)   # partial last block handled by Pallas

    in_specs = [
        pl.BlockSpec((tile_b, in_dim), lambda i: (i, 0)),   # batch-tiled state
        pl.BlockSpec(w_c.shape, lambda i: (0, 0)),          # collapsed weight, VMEM-resident
        pl.BlockSpec(b_c.shape, lambda i: (0, 0)),          # collapsed bias, VMEM-resident
    ]
    out_specs = pl.BlockSpec((tile_b, out_dim), lambda i: (i, 0))

    flops = 2 * batch * in_dim * out_dim
    bytes_accessed = (
        int(state.size) * int(state.dtype.itemsize)
        + int(w_c.size) * int(w_c.dtype.itemsize)
        + int(b_c.size) * 4
        + batch * out_dim * 4
    )

    return pl.pallas_call(
        _fused_affine_kernel,
        out_shape=jax.ShapeDtypeStruct((batch, out_dim), jnp.float32),
        grid=grid,
        in_specs=in_specs,
        out_specs=out_specs,
        compiler_params=pltpu.CompilerParams(
            dimension_semantics=("parallel",),     # both TCs on v7x when grid >= 2
            vmem_limit_bytes=32 * 1024 * 1024,     # safe on v5e/v6e/v7x
        ),
        cost_estimate=pl.CostEstimate(
            flops=flops, transcendentals=0, bytes_accessed=bytes_accessed),
    )(state, w_c, b_c)


def init_params(key, num_inputs, hidden_size, number_of_layers):
    """Deterministic init mimicking PyTorch nn.Linear default (uniform +-1/sqrt(fan_in))."""
    layer_dims = (
        [(num_inputs, hidden_size)]
        + [(hidden_size, hidden_size) for _ in range(number_of_layers - 1)]
        + [(hidden_size, 2)]  # actor_layer
    )
    weights, biases = [], []
    for fan_in, fan_out in layer_dims:
        key, kw, kb = jax.random.split(key, 3)
        bound = 1.0 / (fan_in ** 0.5)
        # stored as [in, out] (transpose of PyTorch's [out, in])
        weights.append(
            jax.random.uniform(kw, (fan_in, fan_out), jnp.float32, -bound, bound))
        biases.append(
            jax.random.uniform(kb, (fan_out,), jnp.float32, -bound, bound))
    return weights, biases


def reference_forward(state, weights, biases):
    h = state
    for w, b in zip(weights, biases):
        h = h @ w + b
    return h


# TODO(synk): the torch.optim.Adam optimizer attached to the module is training
# machinery with no forward-pass Pallas equivalent; only forward() is kernelized.

if __name__ == "__main__":
    # Small shapes consistent with the module's forward.
    batch = 2
    num_inputs = 16
    hidden_size = 32
    number_of_layers = 2  # -> Linear(16,32), Linear(32,32), actor Linear(32,2)

    key = jax.random.PRNGKey(0)
    key, kx = jax.random.split(key)
    state = jax.random.normal(kx, (batch, num_inputs), jnp.float32)

    weights, biases = init_params(key, num_inputs, hidden_size, number_of_layers)

    # One-time parameter packing (collapsed affine chain) — NOT per call.
    packed = prepare_params(weights, biases)

    out = linear_net_continuous_forward(state, packed)
    out = jax.block_until_ready(out)
    assert out.shape == (batch, 2), out.shape

    # Tight check against the collapsed-chain weights read back in f32: the only
    # remaining delta is the bf16 weight/activation cast + f32-accum matmul.
    ref_collapsed = state @ packed[0].astype(jnp.float32) + packed[1]
    assert jnp.allclose(out, ref_collapsed, atol=2e-2, rtol=2e-2), (out, ref_collapsed)

    # Loose sanity check against the original per-layer full-f32 module math.
    ref_f32 = reference_forward(state, weights, biases)
    assert jnp.allclose(out, ref_f32, atol=1e-1, rtol=1e-1), (out, ref_f32)

    print("KERNEL_OK")
</pallas_src>

<mosaic_0001>
module attributes {stable_mosaic.version = 11 : i64} {
  func.func @_fused_affine_kernel(%arg0: i32, %arg1: memref<8x16xf32, #tpu.memory_space<vmem>>, %arg2: memref<16x2xbf16, #tpu.memory_space<vmem>>, %arg3: memref<1x2xf32, #tpu.memory_space<vmem>>, %arg4: memref<8x2xf32, #tpu.memory_space<vmem>>) attributes {dimension_semantics = [#tpu.dimension_semantics<parallel>], iteration_bounds = array<i64: 1>, scalar_prefetch = 0 : i64, scratch_operands = 0 : i64, tpu.core_type = #tpu.core_type<tc>, window_params = [{transform_indices = @transform_0, window_bounds = array<i64: 8, 16>}, {pipeline_mode = #tpu.pipeline_mode<synchronous>, transform_indices = @transform_1, window_bounds = array<i64: 16, 2>}, {pipeline_mode = #tpu.pipeline_mode<synchronous>, transform_indices = @transform_2, window_bounds = array<i64: 1, 2>}, {transform_indices = @transform_3, window_bounds = array<i64: 8, 2>}]} {
    %c0 = arith.constant 0 : index
    %c0_0 = arith.constant 0 : index
    %0 = vector.load %arg1[%c0, %c0_0] : memref<8x16xf32, #tpu.memory_space<vmem>>, vector<8x16xf32>
    %1 = arith.truncf %0 : vector<8x16xf32> to vector<8x16xbf16>
    %c0_1 = arith.constant 0 : index
    %c0_2 = arith.constant 0 : index
    %2 = vector.load %arg2[%c0_1, %c0_2] : memref<16x2xbf16, #tpu.memory_space<vmem>>, vector<16x2xbf16>
    %cst = arith.constant dense<0.000000e+00> : vector<8x2xf32>
    %3 = tpu.matmul %1, %2, %cst {dimension_numbers = #tpu.dot_dimension_numbers<[1], [0], [0], [1], [0, 0, 1, 1], [], []>} : vector<8x16xbf16>, vector<16x2xbf16>, vector<8x2xf32> -> vector<8x2xf32>
    %c0_3 = arith.constant 0 : index
    %c0_4 = arith.constant 0 : index
    %4 = vector.load %arg3[%c0_3, %c0_4] : memref<1x2xf32, #tpu.memory_space<vmem>>, vector<1x2xf32>
    %5 = vector.broadcast %4 : vector<1x2xf32> to vector<8x2xf32>
    %6 = arith.addf %3, %5 : vector<8x2xf32>
    %c0_5 = arith.constant 0 : index
    %c0_6 = arith.constant 0 : index
    %7 = vector.load %arg4[%c0_5, %c0_6] : memref<8x2xf32, #tpu.memory_space<vmem>>, vector<8x2xf32>
    tpu.vector_store %arg4[%c0_5, %c0_6], %6 {strides = array<i32>} : memref<8x2xf32, #tpu.memory_space<vmem>>, vector<8x2xf32>,
    return
  }
  func.func @transform_0(%arg0: i32) -> (i32, i32) {
    %c0_i32 = arith.constant 0 : i32
    %c0_i32_0 = arith.constant 0 : i32
    return %arg0, %c0_i32 : i32, i32
  }
  func.func @transform_1(%arg0: i32) -> (i32, i32) {
    %c0_i32 = arith.constant 0 : i32
    %c0_i32_0 = arith.constant 0 : i32
    %c0_i32_1 = arith.constant 0 : i32
    return %c0_i32, %c0_i32_0 : i32, i32
  }
  func.func @transform_2(%arg0: i32) -> (i32, i32) {
    %c0_i32 = arith.constant 0 : i32
    %c0_i32_0 = arith.constant 0 : i32
    %c0_i32_1 = arith.constant 0 : i32
    return %c0_i32, %c0_i32_0 : i32, i32
  }
  func.func @transform_3(%arg0: i32) -> (i32, i32) {
    %c0_i32 = arith.constant 0 : i32
    %c0_i32_0 = arith.constant 0 : i32
    return %arg0, %c0_i32 : i32, i32
  }
}

</mosaic_0001>

<llo_original>
// kernel: tpu_custom_call.1
$region0: #{tpu_custom_call.1}
  #allocation0 [shape = 'u32[]', space=smem, size = 0x4, offset = 0x4, fixed_abs, tag = 'smem constant byte address 0x4 - core index']
  #allocation1 [shape = 'u32[72,128]{1,0:T(1,128)}', space=vmem, size = 0x9000, scoped, tag = 'internal scratch']
  %s0 = inlined_call_operand.vmem [shape: f32[2,16], index: 0, kind: input, shape index: {}]
  %s1 = inlined_call_operand.vmem [shape: bf16[16,2], index: 1, kind: input, shape index: {}]
  %s2 = inlined_call_operand.vmem [shape: f32[1,2], index: 2, kind: input, shape index: {}]
  %s3 = inlined_call_operand.hbm [shape: f32[2,2], index: 3, kind: output, shape index: {}]
  %s4 = sld [smem:[#allocation0]]
  $region22: #{tpu_custom_call.1} parent=0
    _
  %s6 = ssub.s32 1, %s4
  %s7 = scalar_select 0, %s6, %s4
  $region1: #{tpu_custom_call.1} parent=0
    #allocation2 [shape = 'u8[4096]{0}', space=vmem, size = 0x1000, scoped, tag = 'output window, operand 0, single buffered']
    #allocation3 [shape = 's32[1]{0}', space=sflag, size = 0x4, scoped, tag = 'scoped memory for tpu_custom_call.1']
    %8 = vsyncpa [#allocation3], 0
    // Predicated region
    $region2: #{tpu_custom_call.1} parent=1 // pred_check
      _
    $region3: #{tpu_custom_call.1} parent=1 // pred_check_branch
      %10 = sbr.rel (0) target = $region5
    $region4: #{tpu_custom_call.1} parent=1 // pred_region
      _
    $region5: #{tpu_custom_call.1} parent=1 // pred_fallthru
      _
    // Predicated region
    $region6: #{tpu_custom_call.1} parent=1 // pred_check
      _
    $region7: #{tpu_custom_call.1} parent=1 // pred_check_branch
      %12 = sbr.rel (0) target = $region9
    $region8: #{tpu_custom_call.1} parent=1 // pred_region
      _
    $region9: #{tpu_custom_call.1} parent=1 // pred_fallthru
      _
    // Predicated region
    $region10: #{tpu_custom_call.1} parent=1 // pred_check
      _
    $region11: #{tpu_custom_call.1} parent=1 // pred_check_branch
      %14 = sbr.rel (0) target = $region13
    $region12: #{tpu_custom_call.1} parent=1 // pred_region
      _
    $region13: #{tpu_custom_call.1} parent=1 // pred_fallthru
      _
    %v16 = vld [vmem:[%s0] sm:$0xff]
    %v17 = vpack.c.bf16 %v16, %v16
    %v18 = vld [vmem:[%s1] sm:$0xf]
    %v19 = vld [vmem:[%s1 + $0x4] sm:$0xf]
    %v20 = vld [vmem:[%s2] sm:$0x1]
    %v22 = vperm.slane %v20, 0
    %v26 = vunpack.c.l.b16 %v18
    %v27 = vunpack.c.l.b16 %v19
    %v28 = vpack.c.b16 %v27, %v26
    %vm30 = vcmask 130048
    %v32 = vsel %vm30, %v17, 0
    %34 = vmatpush.bf16.msra.mxu0 0
    %35 = vmatpush.bf16.msra.mxu0 0
    %36 = vmatpush.bf16.msra.mxu0 0
    %37 = vmatpush.bf16.msra.mxu0 0
    %38 = vmatpush.bf16.msra.mxu0 0
    %39 = vmatpush.bf16.msra.mxu0 0
    %40 = vmatpush.bf16.msra.mxu0 0
    %41 = vmatpush.bf16.msra.mxu0 %v28
    %42 = vmatmul.bf16.gmra.mxu0 %v32
    %v43 = vpop.f32.mrf.mxu0
    %v44 = vadd.f32 %v22, %v43
    %v45 = vpop.f32.mrf.mxu0
    %46 = vdwg.mxu0
    %vm47 = vcmask 15360
    %48 = vst.msk [vmem:[#allocation2] sm:$0xff] %vm47, %v44
    // Predicated region
    $region14: #{tpu_custom_call.1} parent=1 // pred_check
      _
    $region15: #{tpu_custom_call.1} parent=1 // pred_check_branch
      %50 = sbr.rel (0) target = $region17
    $region16: #{tpu_custom_call.1} parent=1 // pred_region
      %52 = vsyncadd [#allocation3], 96
      %s53 = sshll.u32 [#allocation2], 4
      %s54 = int_to_ptr.vmem [resolvable:$true] %s53
      %s55 = sshll.u32 %s3, 4
      %s56 = int_to_ptr.hbm [resolvable:$true] %s55
      %61 = dma.vmem_to_hbm [thread:$0]  %s54, 32, %s56, [#allocation3], 32, 32, 2
    $region17: #{tpu_custom_call.1} parent=1 // pred_fallthru
      _
    // Predicated region
    $region18: #{tpu_custom_call.1} parent=1 // pred_check
      _
    $region19: #{tpu_custom_call.1} parent=1 // pred_check_branch
      %63 = sbr.rel (0) target = $region21
    $region20: #{tpu_custom_call.1} parent=1 // pred_region
      %65 = dma.done [#allocation3], 128
    $region21: #{tpu_custom_call.1} parent=1 // pred_fallthru
      _
    %66 = vsyncpa [#allocation3], 1

</llo_original>
